<compile_context>
chip_gen: v6e
topology: v6e:2x2x1
jax: 0.10.0
libtpu: 0.0.40
codegen_flags: <defaults>
</compile_context>

<pallas_src>
import functools

import jax
import jax.numpy as jnp
from jax.experimental import pallas as pl
from jax.experimental.pallas import tpu as pltpu


def _round_up(x, m):
    return ((x + m - 1) // m) * m


def _reward_criterion_kernel(logp_ref, seq_ref, reward_ref, out_ref, *, batch, tb):
    logp = logp_ref[...].astype(jnp.float32)      # [TB, T]
    seq = seq_ref[...]                            # [TB, T] int32
    reward = reward_ref[...].astype(jnp.float32)  # [TB, T]

    shape = seq.shape
    # Global row index of each row in this block (kills the garbage tail of a
    # partial last block and any other out-of-range rows).
    row = jax.lax.broadcasted_iota(jnp.int32, shape, 0) + pl.program_id(0) * tb
    col = jax.lax.broadcasted_iota(jnp.int32, shape, 1)

    # Shifted mask: column 0 forced to 1, column t>=1 uses (seq[:, t-1] > 0).
    # pltpu.roll wraps column T-1 into column 0, but that wrapped value is
    # overridden by the col == 0 branch, so keeping T whole per block is exact.
    prev_seq = pltpu.roll(seq, shift=1, axis=1)
    keep = jnp.logical_and(jnp.logical_or(col == 0, prev_seq > 0), row < batch)

    # Predicated select (NOT multiply-by-mask): stale/garbage data in the
    # out-of-bounds tail of the last partial block may be NaN/Inf and must not
    # leak through NaN * 0.
    val = jnp.where(keep, logp * reward, jnp.float32(0.0))

    # Reduce only across sublanes; keep per-lane partials.  Cross-lane and
    # cross-block reduction + negate + divide happen in the JAX epilogue.
    num_lane = jnp.sum(val, axis=0, keepdims=True)                            # (1, T)
    den_lane = jnp.sum(keep.astype(jnp.float32), axis=0, keepdims=True)       # (1, T)
    out_ref[...] = jnp.concatenate([num_lane, den_lane], axis=0)[None]        # (1, 2, T)


def reward_criterion(logp, seq, reward, *, block_b=None):
    """Pallas TPU implementation of RewardCriterion.forward."""
    B, T = logp.shape
    assert seq.shape == (B, T) and reward.shape == (B, T)

    # seq must be int32 (int64 would double that stream's HBM traffic and may
    # not lower cleanly).
    if seq.dtype != jnp.int32:
        seq = seq.astype(jnp.int32)

    # Worst-case per-stream itemsize (logp/reward may be bf16; seq is int32).
    itemsize = max(logp.dtype.itemsize, reward.dtype.itemsize, 4)

    # ---- generation-aware block / VMEM budget --------------------------------
    try:
        vmem_cap = int(pltpu.get_tpu_info().vmem_capacity_bytes)
    except Exception:  # pragma: no cover - conservative fallback
        vmem_cap = None

    if vmem_cap is not None and vmem_cap >= 100 * 1024 * 1024:
        # v5e / v6e: 128 MiB physical VMEM -> ~8 MiB per stream per buffer.
        stream_budget = 8 * 1024 * 1024
        vmem_limit = 64 * 1024 * 1024
        force_two_blocks = False
    else:
        # v7x (64 MiB per TC) or unknown hardware: stay conservative, and make
        # sure both TensorCores get grid steps under dimension_semantics=parallel.
        stream_budget = 4 * 1024 * 1024
        vmem_limit = 40 * 1024 * 1024
        force_two_blocks = True

    if block_b is not None:
        tb = max(1, min(B, int(block_b)))
    else:
        tb = max(1, stream_budget // max(T * itemsize, 1))
        if force_two_blocks and B > 8:
            tb = min(tb, _round_up(pl.cdiv(B, 2), 8))

    # Sublane alignment: tb must be a multiple of 8 unless it equals B exactly.
    if tb >= B:
        tb = B
    else:
        tb = max(8, (tb // 8) * 8)
        if tb >= B:
            tb = B
    nb = pl.cdiv(B, tb)   # NO padding: the last block may be partial.

    kernel = functools.partial(_reward_criterion_kernel, batch=B, tb=tb)

    in_bytes = (logp.size * logp.dtype.itemsize
                + seq.size * 4
                + reward.size * reward.dtype.itemsize)
    out_bytes = nb * 2 * T * 4
    cost = pl.CostEstimate(flops=5 * B * T, transcendentals=0,
                           bytes_accessed=in_bytes + out_bytes)

    partials = pl.pallas_call(
        kernel,
        out_shape=jax.ShapeDtypeStruct((nb, 2, T), jnp.float32),
        grid_spec=pltpu.PrefetchScalarGridSpec(
            num_scalar_prefetch=0,
            grid=(nb,),
            in_specs=[
                pl.BlockSpec((tb, T), lambda i: (i, 0)),   # logp
                pl.BlockSpec((tb, T), lambda i: (i, 0)),   # seq
                pl.BlockSpec((tb, T), lambda i: (i, 0)),   # reward
            ],
            out_specs=pl.BlockSpec((1, 2, T), lambda i: (i, 0, 0)),
        ),
        compiler_params=pltpu.CompilerParams(
            dimension_semantics=("parallel",),             # v7x: shard across both TCs
            vmem_limit_bytes=vmem_limit,
        ),
        cost_estimate=cost,
    )(logp, seq, reward)

    # Tiny final reduction + single negation + exact division in JAX.
    num = jnp.sum(partials[:, 0, :])
    den = jnp.sum(partials[:, 1, :])
    return -(num / den)


def _reference(logp, seq, reward):
    # Pure-JAX reference mirroring the PyTorch code.
    B, T = logp.shape
    mask = (seq > 0).astype(jnp.float32)
    mask = jnp.concatenate([jnp.ones((B, 1), jnp.float32), mask[:, :-1]], axis=1)
    out = -logp.astype(jnp.float32) * reward.astype(jnp.float32) * mask
    return jnp.sum(out) / jnp.sum(mask)


if __name__ == "__main__":
    key = jax.random.PRNGKey(0)
    ks = jax.random.split(key, 9)

    # --- test 1: tiny shape, single block ------------------------------------
    B, T = 2, 8
    logp = -jax.random.uniform(ks[0], (B, T), dtype=jnp.float32, minval=0.1, maxval=5.0)
    seq = jax.random.randint(ks[1], (B, T), minval=0, maxval=4, dtype=jnp.int32)
    reward = jax.random.normal(ks[2], (B, T), dtype=jnp.float32)

    out = jax.block_until_ready(reward_criterion(logp, seq, reward))
    ref = _reference(logp, seq, reward)
    assert jnp.allclose(out, ref, rtol=1e-5, atol=1e-5), (out, ref)

    # --- test 2: multi-block grid + ragged batch (partial last block) --------
    B2, T2 = 20, 16
    logp2 = -jax.random.uniform(ks[3], (B2, T2), dtype=jnp.float32, minval=0.1, maxval=5.0)
    seq2 = jax.random.randint(ks[4], (B2, T2), minval=0, maxval=3, dtype=jnp.int32)
    reward2 = jax.random.normal(ks[5], (B2, T2), dtype=jnp.float32)

    out2 = jax.block_until_ready(reward_criterion(logp2, seq2, reward2, block_b=8))
    ref2 = _reference(logp2, seq2, reward2)
    assert jnp.allclose(out2, ref2, rtol=1e-5, atol=1e-5), (out2, ref2)

    # --- test 3: bf16 logp/reward (producer-side dtype), auto block size -----
    B3, T3 = 24, 32
    logp3 = (-jax.random.uniform(ks[6], (B3, T3), dtype=jnp.float32,
                                 minval=0.1, maxval=5.0)).astype(jnp.bfloat16)
    seq3 = jax.random.randint(ks[7], (B3, T3), minval=0, maxval=3, dtype=jnp.int32)
    reward3 = jax.random.normal(ks[8], (B3, T3), dtype=jnp.float32).astype(jnp.bfloat16)

    out3 = jax.block_until_ready(reward_criterion(logp3, seq3, reward3))
    ref3 = _reference(logp3, seq3, reward3)
    assert jnp.allclose(out3, ref3, rtol=1e-5, atol=1e-5), (out3, ref3)

    print("KERNEL_OK")
</pallas_src>

<mosaic_0001>
module attributes {stable_mosaic.version = 11 : i64} {
  func.func @_reward_criterion_kernel(%arg0: i32, %arg1: memref<2x8xf32, #tpu.memory_space<vmem>>, %arg2: memref<2x8xi32, #tpu.memory_space<vmem>>, %arg3: memref<2x8xf32, #tpu.memory_space<vmem>>, %arg4: memref<1x2x8xf32, #tpu.memory_space<vmem>>) attributes {dimension_semantics = [#tpu.dimension_semantics<parallel>], iteration_bounds = array<i64: 1>, scalar_prefetch = 0 : i64, scratch_operands = 0 : i64, tpu.core_type = #tpu.core_type<tc>, window_params = [{transform_indices = @transform_0, window_bounds = array<i64: 2, 8>}, {transform_indices = @transform_1, window_bounds = array<i64: 2, 8>}, {transform_indices = @transform_2, window_bounds = array<i64: 2, 8>}, {transform_indices = @transform_3, window_bounds = array<i64: 1, 2, 8>}]} {
    %c0 = arith.constant 0 : index
    %c0_0 = arith.constant 0 : index
    %0 = vector.load %arg1[%c0, %c0_0] : memref<2x8xf32, #tpu.memory_space<vmem>>, vector<2x8xf32>
    %c0_1 = arith.constant 0 : index
    %c0_2 = arith.constant 0 : index
    %1 = vector.load %arg2[%c0_1, %c0_2] : memref<2x8xi32, #tpu.memory_space<vmem>>, vector<2x8xi32>
    %c0_3 = arith.constant 0 : index
    %c0_4 = arith.constant 0 : index
    %2 = vector.load %arg3[%c0_3, %c0_4] : memref<2x8xf32, #tpu.memory_space<vmem>>, vector<2x8xf32>
    %3 = tpu.iota {dimensions = array<i32: 0>} : vector<2x8xi32>
    %c2_i32 = arith.constant 2 : i32
    %4 = arith.muli %arg0, %c2_i32 : i32
    %5 = vector.broadcast %4 : i32 to vector<2x8xi32>
    %6 = arith.addi %3, %5 : vector<2x8xi32>
    %7 = tpu.iota {dimensions = array<i32: 1>} : vector<2x8xi32>
    %c1_i32 = arith.constant 1 : i32
    %8 = tpu.dynamic_rotate %1 by %c1_i32 dim 1 : vector<2x8xi32>, i32 -> vector<2x8xi32>
    %c0_i32 = arith.constant 0 : i32
    %9 = vector.broadcast %c0_i32 : i32 to vector<2x8xi32>
    %10 = arith.cmpi eq, %7, %9 : vector<2x8xi32>
    %c0_i32_5 = arith.constant 0 : i32
    %11 = vector.broadcast %c0_i32_5 : i32 to vector<2x8xi32>
    %12 = arith.cmpi sgt, %8, %11 : vector<2x8xi32>
    %13 = arith.ori %10, %12 : vector<2x8xi1>
    %c2_i32_6 = arith.constant 2 : i32
    %14 = vector.broadcast %c2_i32_6 : i32 to vector<2x8xi32>
    %15 = arith.cmpi slt, %6, %14 : vector<2x8xi32>
    %16 = arith.andi %13, %15 : vector<2x8xi1>
    %17 = arith.mulf %0, %2 : vector<2x8xf32>
    %cst = arith.constant 0.000000e+00 : f32
    %18 = vector.broadcast %cst : f32 to vector<2x8xf32>
    %19 = arith.select %16, %17, %18 : vector<2x8xi1>, vector<2x8xf32>
    %cst_7 = arith.constant dense<0.000000e+00> : vector<8xf32>
    %20 = vector.multi_reduction <add>, %19, %cst_7 [0] : vector<2x8xf32> to vector<8xf32>
    %21 = vector.shape_cast %20 : vector<8xf32> to vector<1x8xf32>
    %22 = arith.extui %16 : vector<2x8xi1> to vector<2x8xi32>
    %23 = arith.sitofp %22 : vector<2x8xi32> to vector<2x8xf32>
    %cst_8 = arith.constant dense<0.000000e+00> : vector<8xf32>
    %24 = vector.multi_reduction <add>, %23, %cst_8 [0] : vector<2x8xf32> to vector<8xf32>
    %25 = vector.shape_cast %24 : vector<8xf32> to vector<1x8xf32>
    %26 = tpu.concatenate %21, %25 in 0 : vector<1x8xf32>, vector<1x8xf32> -> vector<2x8xf32>
    %27 = vector.shape_cast %26 : vector<2x8xf32> to vector<1x2x8xf32>
    %c0_9 = arith.constant 0 : index
    %c0_10 = arith.constant 0 : index
    %c0_11 = arith.constant 0 : index
    %28 = vector.load %arg4[%c0_9, %c0_10, %c0_11] : memref<1x2x8xf32, #tpu.memory_space<vmem>>, vector<1x2x8xf32>
    tpu.vector_store %arg4[%c0_9, %c0_10, %c0_11], %27 {strides = array<i32>} : memref<1x2x8xf32, #tpu.memory_space<vmem>>, vector<1x2x8xf32>,
    return
  }
  func.func @transform_0(%arg0: i32) -> (i32, i32) {
    %c0_i32 = arith.constant 0 : i32
    %c0_i32_0 = arith.constant 0 : i32
    return %arg0, %c0_i32 : i32, i32
  }
  func.func @transform_1(%arg0: i32) -> (i32, i32) {
    %c0_i32 = arith.constant 0 : i32
    %c0_i32_0 = arith.constant 0 : i32
    return %arg0, %c0_i32 : i32, i32
  }
  func.func @transform_2(%arg0: i32) -> (i32, i32) {
    %c0_i32 = arith.constant 0 : i32
    %c0_i32_0 = arith.constant 0 : i32
    return %arg0, %c0_i32 : i32, i32
  }
  func.func @transform_3(%arg0: i32) -> (i32, i32, i32) {
    %c0_i32 = arith.constant 0 : i32
    %c0_i32_0 = arith.constant 0 : i32
    %c0_i32_1 = arith.constant 0 : i32
    return %arg0, %c0_i32, %c0_i32_0 : i32, i32, i32
  }
}

</mosaic_0001>

<llo_original>
// kernel: tpu_custom_call.1
$region0: #{tpu_custom_call.1}
  #allocation0 [shape = 'u32[]', space=smem, size = 0x4, offset = 0x4, fixed_abs, tag = 'smem constant byte address 0x4 - core index']
  #allocation1 [shape = 'u32[144,128]{1,0:T(1,128)}', space=vmem, size = 0x12000, scoped, tag = 'internal scratch']
  %s0 = inlined_call_operand.hbm [shape: f32[2,8], index: 0, kind: input, shape index: {}]
  %s1 = inlined_call_operand.hbm [shape: s32[2,8], index: 1, kind: input, shape index: {}]
  %s2 = inlined_call_operand.vmem [shape: f32[2,8], index: 2, kind: input, shape index: {}]
  %s3 = inlined_call_operand.hbm [shape: f32[1,2,8], index: 3, kind: output, shape index: {}]
  %s4 = sld [smem:[#allocation0]]
  $region30: #{tpu_custom_call.1} parent=0
    _
  %s6 = ssub.s32 1, %s4
  %s7 = scalar_select 0, %s6, %s4
  $region1: #{tpu_custom_call.1} parent=0
    #allocation2 [shape = 'u8[1024]{0}', space=vmem, size = 0x400, scoped, tag = 'input window, operand 0, single buffered']
    #allocation3 [shape = 's32[1]{0}', space=sflag, size = 0x4, scoped, tag = 'scoped memory for tpu_custom_call.1']
    #allocation4 [shape = 's32[1]{0}', space=sflag, size = 0x4, scoped, tag = 'scoped memory for tpu_custom_call.1']
    #allocation5 [shape = 'u8[1024]{0}', space=vmem, size = 0x400, scoped, tag = 'input window, operand 1, single buffered']
    #allocation6 [shape = 's32[1]{0}', space=sflag, size = 0x4, scoped, tag = 'scoped memory for tpu_custom_call.1']
    #allocation7 [shape = 'u8[1024]{0}', space=vmem, size = 0x400, scoped, tag = 'output window, operand 0, single buffered']
    %8 = vsyncpa [#allocation3], 0
    %9 = vsyncpa [#allocation6], 0
    %10 = vsyncpa [#allocation4], 0
    // Predicated region
    $region2: #{tpu_custom_call.1} parent=1 // pred_check
      _
    $region3: #{tpu_custom_call.1} parent=1 // pred_check_branch
      %12 = sbr.rel (0) target = $region5
    $region4: #{tpu_custom_call.1} parent=1 // pred_region
      %s14 = ssub.s32 32, 32
      %15 = vsyncadd [#allocation3], %s14
      %s17 = sshll.u32 [#allocation2], 4
      %s18 = int_to_ptr.vmem [resolvable:$true] %s17
      %20 = dma.hbm_to_vmem [thread:$0]  %s0, 32, %s18, [#allocation3]
    $region5: #{tpu_custom_call.1} parent=1 // pred_fallthru
      _
    // Predicated region
    $region6: #{tpu_custom_call.1} parent=1 // pred_check
      _
    $region7: #{tpu_custom_call.1} parent=1 // pred_check_branch
      %22 = sbr.rel (0) target = $region9
    $region8: #{tpu_custom_call.1} parent=1 // pred_region
      %s24 = ssub.s32 32, 32
      %25 = vsyncadd [#allocation6], %s24
      %s27 = sshll.u32 [#allocation5], 4
      %s28 = int_to_ptr.vmem [resolvable:$true] %s27
      %30 = dma.hbm_to_vmem [thread:$0]  %s1, 32, %s28, [#allocation6]
    $region9: #{tpu_custom_call.1} parent=1 // pred_fallthru
      _
    // Predicated region
    $region10: #{tpu_custom_call.1} parent=1 // pred_check
      _
    $region11: #{tpu_custom_call.1} parent=1 // pred_check_branch
      %32 = sbr.rel (0) target = $region13
    $region12: #{tpu_custom_call.1} parent=1 // pred_region
      _
    $region13: #{tpu_custom_call.1} parent=1 // pred_fallthru
      _
    // Predicated region
    $region14: #{tpu_custom_call.1} parent=1 // pred_check
      _
    $region15: #{tpu_custom_call.1} parent=1 // pred_check_branch
      %34 = sbr.rel (0) target = $region17
    $region16: #{tpu_custom_call.1} parent=1 // pred_region
      %35 = dma.done [#allocation3], 32
    $region17: #{tpu_custom_call.1} parent=1 // pred_fallthru
      _
    // Predicated region
    $region18: #{tpu_custom_call.1} parent=1 // pred_check
      _
    $region19: #{tpu_custom_call.1} parent=1 // pred_check_branch
      %37 = sbr.rel (0) target = $region21
    $region20: #{tpu_custom_call.1} parent=1 // pred_region
      %38 = dma.done [#allocation6], 32
    $region21: #{tpu_custom_call.1} parent=1 // pred_fallthru
      _
    %v39 = vld [vmem:[#allocation2] sm:$0x3]
    %v40 = vld [vmem:[#allocation5] sm:$0x3]
    %v41 = vld [vmem:[%s2] sm:$0x3]
    %v42 = vlaneseq
    %v43 = vshrl.u32 %v42, 7
    %s44 = smul.u32 0, 2
    %v45 = vstv %s44
    %v46 = vadd.s32 %v43, %v45
    %v47 = vlaneseq
    %v48 = vand.u32 %v47, 127
    %vm49 = vcmask 1047616
    %50 = vrot.lane.b32.xlu0 %v40, 8
    %v51 = vpop.permute.xlu0 %50
    %v52 = vsel %vm49, %v51, %v40
    %53 = vrot.lane.b32.xlu0 %v52, 8
    %v54 = vpop.permute.xlu0 %53
    %v55 = vsel %vm49, %v54, %v40
    %vm56 = vcmp.eq.s32.totalorder %v48, 0
    %vm57 = vcmp.gt.s32.totalorder %v55, 0
    %v58 = vsel %vm57, 1, 0
    %59 = vrot.lane.b32.xlu0 %v58, 121
    %v60 = vpop.permute.xlu0 %59
    %vm61 = vcmp.ne.s32.totalorder %v60, 0
    %vm62 = vmor %vm56, %vm61
    %vm63 = vcmp.lt.s32.totalorder %v46, 2
    %vm64 = vmand %vm62, %vm63
    %v65 = vmul.f32 %v39, %v41
    %v66 = vsel %vm64, %v65, 0.0
    %vm67 = vcmask 58368
    %v68 = vsel %vm67, %v66, 0.0
    %v69 = vrot.slane %v68, 4
    %v70 = vadd.f32 %v68, %v69
    %v71 = vrot.slane %v70, 2
    %v72 = vadd.f32 %v70, %v71
    %v73 = vrot.slane %v72, 1
    %v74 = vadd.f32 %v72, %v73
    %v75 = vsel %vm64, 1, 0
    %v76 = vcvt.s32.f32 %v75
    %v77 = vsel %vm67, %v76, 0.0
    %v78 = vrot.slane %v77, 4
    %v79 = vadd.f32 %v77, %v78
    %v80 = vrot.slane %v79, 2
    %v81 = vadd.f32 %v79, %v80
    %v82 = vrot.slane %v81, 1
    %v83 = vadd.f32 %v81, %v82
    %vm84 = vcmask 1040384
    %v85 = vsel %vm84, %v74, %v83
    %86 = vst.msk [vmem:[#allocation7] sm:$0x3] %vm67, %v85
    // Predicated region
    $region22: #{tpu_custom_call.1} parent=1 // pred_check
      _
    $region23: #{tpu_custom_call.1} parent=1 // pred_check_branch
      %88 = sbr.rel (0) target = $region25
    $region24: #{tpu_custom_call.1} parent=1 // pred_region
      %s90 = ssub.s32 32, 32
      %91 = vsyncadd [#allocation4], %s90
      %s93 = sshll.u32 [#allocation7], 4
      %s94 = int_to_ptr.vmem [resolvable:$true] %s93
      %96 = dma.vmem_to_hbm [thread:$0]  %s94, 32, %s3, [#allocation4]
    $region25: #{tpu_custom_call.1} parent=1 // pred_fallthru
      _
    // Predicated region
    $region26: #{tpu_custom_call.1} parent=1 // pred_check
      _
    $region27: #{tpu_custom_call.1} parent=1 // pred_check_branch
      %98 = sbr.rel (0) target = $region29
    $region28: #{tpu_custom_call.1} parent=1 // pred_region
      %99 = dma.done [#allocation4], 32
    $region29: #{tpu_custom_call.1} parent=1 // pred_fallthru
      _
    %100 = vsyncpa [#allocation3], 1
    %101 = vsyncpa [#allocation6], 1
    %102 = vsyncpa [#allocation4], 1

</llo_original>
